<compile_context>
chip_gen: v6e
topology: v6e:2x2x1
jax: 0.10.0
libtpu: 0.0.40
codegen_flags: <defaults>
</compile_context>

<pallas_src>
import jax
import jax.numpy as jnp
import numpy as np
from jax.experimental import pallas as pl
from jax.experimental.pallas import tpu as pltpu


# --------------------------------------------------------------------------
# Kernel
# --------------------------------------------------------------------------
def ft_ppi_onehot_kernel(x_ref, wcat_ref, b1_ref, w2_ref, b2_ref, out_ref):
    x = x_ref[...]                                   # (TB, S) int32 token ids
    TB, S = x.shape
    V, Wp = wcat_ref.shape

    # One-hot, flattened to (TB*S, V) with the vocab axis on lanes.  bf16 is
    # exact for {0,1} and halves the dominant VMEM slab / store traffic.
    voc = jax.lax.broadcasted_iota(jnp.int32, (TB, S, V), 2)
    onehot = (x[:, :, None] == voc).astype(jnp.bfloat16)          # (TB, S, V)

    # Single fused MXU matmul (M = TB*S, K = V, N = Wp).  Each one-hot row has
    # exactly one non-zero, so the f32-accumulated result is exactly the
    # selected weight rows: col 0 = attention logit, cols 1..H = linear1 row.
    g = jnp.dot(onehot.reshape(TB * S, V), wcat_ref[...],
                preferred_element_type=jnp.float32)               # (TB*S, Wp)
    g = g.reshape(TB, S, Wp)

    # Masked softmax over the sequence (pad token id == 0).  compute_weight's
    # bias is a uniform shift of the non-masked logits and cancels here, so
    # it is dropped entirely.  Exact reciprocal: only TB*S values, free.
    aw = g[:, :, 0:1]                                             # (TB, S, 1)
    aw = jnp.where(x[:, :, None] > 0, aw, -1000000000.0)
    aw = aw - jnp.max(aw, axis=1, keepdims=True)
    e = jnp.exp(aw)
    attn = e / jnp.sum(e, axis=1, keepdims=True)                  # (TB, S, 1)

    # Attention pooling == attn-weighted sum of the gathered linear1 rows.
    # S is small, so a VPU multiply + sublane reduce beats TB tiny-M matmuls.
    h = jnp.sum(attn * g, axis=1, keepdims=True).reshape(TB, Wp)
    h = jnp.maximum(h + b1_ref[...], 0.0)                         # ReLU

    # linear2 into a lane-dense (TB, 128) logits slab; padded lanes carry a
    # -1e9 bias so they vanish from the log-softmax.  (The garbage column 0
    # of h — the pooled raw logits — meets an all-zero row of w2_pad.)
    logits = jnp.dot(h, w2_ref[...], preferred_element_type=jnp.float32)
    logits = logits + b2_ref[...]                                 # (TB, 128)
    m = jnp.max(logits, axis=-1, keepdims=True)
    lse = m + jnp.log(jnp.sum(jnp.exp(logits - m), axis=-1, keepdims=True))
    out_ref[...] = logits - lse


# --------------------------------------------------------------------------
# Wrapper helpers
# --------------------------------------------------------------------------
def _round_up(n, m):
    return ((n + m - 1) // m) * m


def _default_vmem_limit_bytes():
    """~3/4 of physical VMEM: ~96 MiB on v5e/v6e (128 MiB), ~48 MiB on v7x."""
    try:
        cap = int(pltpu.get_tpu_info().vmem_capacity_bytes)
    except Exception:
        cap = 64 * 1024 * 1024          # conservative: assume v7x-sized VMEM
    return (cap * 3) // 4


def _pick_batch_tile(B, S, V, Wp, max_tile, vmem_budget_bytes):
    """Largest sublane-aligned batch tile whose working set fits the budget,
    capped so the batch grid keeps >= 2 steps when B allows (v7x has 2
    TensorCores and the "parallel" grid axis is sharded across them)."""
    # Resident weights: Pallas double-buffers even constant-index blocks, so
    # count them twice.
    # TODO(synk): pipeline_mode=pl.Buffered(1) on the weight specs would
    # single-buffer them and free V*Wp bytes for a larger batch tile.
    weights = 2 * (V * Wp * 2           # wcat (bf16)
                   + Wp * 4             # b1
                   + Wp * 128 * 4       # w2
                   + 128 * 4)           # b2
    # Per batch-row working set.
    per_row = (S * V * (4 + 2)          # int32 iota / compare + bf16 one-hot
               + 2 * S * Wp * 4         # g and attn*g product (f32)
               + 6 * S * 4              # aw / exp / attn / mask temporaries
               + 3 * Wp * 4             # pooled h temporaries
               + 4 * 128 * 4            # logits / log-softmax temporaries
               + 2 * S * 4              # x block (double-buffered)
               + 2 * 128 * 4)           # out block (double-buffered)
    avail = vmem_budget_bytes - weights
    if avail < 8 * per_row:
        # TODO(synk): V/S-tiled two-phase fallback for very large vocab*seq.
        raise ValueError(
            "FTPPIOneHot one-hot tile does not fit in VMEM (need >= "
            f"{weights + 8 * per_row} bytes, budget {vmem_budget_bytes}); "
            "a V-tiled variant is required at this size.")
    tb = (avail // per_row) // 8 * 8
    tb = min(tb, max_tile, _round_up(-(-B // 2), 8), _round_up(B, 8))
    return max(tb, 8)


def ft_ppi_onehot(x, packed, *, batch_tile=512, vmem_limit_bytes=None):
    B, S = x.shape
    V, Wp = packed["wcat"].shape
    if vmem_limit_bytes is None:
        vmem_limit_bytes = _default_vmem_limit_bytes()
    TB = _pick_batch_tile(B, S, V, Wp, batch_tile, (vmem_limit_bytes * 7) // 8)
    Bp = _round_up(B, TB)
    if Bp != B:
        x = jnp.pad(x, ((0, Bp - B), (0, 0)))   # pad rows = all pad tokens (0)
    grid = (Bp // TB,)

    out = pl.pallas_call(
        ft_ppi_onehot_kernel,
        grid=grid,
        in_specs=[
            pl.BlockSpec((TB, S), lambda i: (i, 0)),      # token ids
            pl.BlockSpec((V, Wp), lambda i: (0, 0)),      # [w_cw | W1^T] bf16
            pl.BlockSpec((1, Wp), lambda i: (0, 0)),      # b1 (lane-padded)
            pl.BlockSpec((Wp, 128), lambda i: (0, 0)),    # W2^T (lane-padded)
            pl.BlockSpec((1, 128), lambda i: (0, 0)),     # b2 (pad lanes -1e9)
        ],
        out_specs=pl.BlockSpec((TB, 128), lambda i: (i, 0)),
        out_shape=jax.ShapeDtypeStruct((Bp, 128), jnp.float32),
        compiler_params=pltpu.CompilerParams(
            dimension_semantics=("parallel",),
            vmem_limit_bytes=int(vmem_limit_bytes),
        ),
    )(x, packed["wcat"], packed["b1_pad"], packed["w2_pad"], packed["b2_pad"])

    return out[:B, :2]


# --------------------------------------------------------------------------
# Params: PyTorch-style init + one-time kernel-layout packing
# --------------------------------------------------------------------------
def init_params(key, vocab_size, hidden):
    """Deterministic nn.Linear-style uniform init U(-1/sqrt(fan_in), +)."""
    ks = jax.random.split(key, 6)

    def lin(kw, kb, fan_in, fan_out):
        bound = 1.0 / np.sqrt(fan_in)
        w = jax.random.uniform(kw, (fan_out, fan_in), jnp.float32, -bound, bound)
        b = jax.random.uniform(kb, (1, fan_out), jnp.float32, -bound, bound)
        return w, b

    w_cw, b_cw = lin(ks[0], ks[1], vocab_size, 1)     # compute_weight: V -> 1
    w1, b1 = lin(ks[2], ks[3], vocab_size, hidden)    # linear1: V -> H
    w2, b2 = lin(ks[4], ks[5], hidden, 2)             # linear2: H -> 2
    return {"w_cw": w_cw, "b_cw": b_cw, "w1": w1, "b1": b1, "w2": w2, "b2": b2}


def pack_params(p):
    """One-time host-side packing into the kernel layout.

    wcat column 0 = compute_weight's weight (attention logit per vocab id),
    columns 1..H = linear1's weight rows (W1^T), lane-padded to a multiple of
    128 and cast to bf16 (the one-hot operand is exact in bf16; the weights
    lose <0.4% relative precision).  compute_weight's bias is intentionally
    dropped — a uniform shift of the attention logits cancels in the softmax.
    """
    H, V = p["w1"].shape
    Wp = _round_up(H + 1, 128)
    wcat = jnp.zeros((V, Wp), jnp.float32)
    wcat = wcat.at[:, 0].set(p["w_cw"][0])
    wcat = wcat.at[:, 1:H + 1].set(p["w1"].T)
    b1_pad = jnp.zeros((1, Wp), jnp.float32).at[0, 1:H + 1].set(p["b1"][0])
    w2_pad = jnp.zeros((Wp, 128), jnp.float32).at[1:H + 1, :2].set(p["w2"].T)
    b2_pad = jnp.full((1, 128), -1e9, jnp.float32).at[0, :2].set(p["b2"][0])
    return {"wcat": wcat.astype(jnp.bfloat16),
            "b1_pad": b1_pad, "w2_pad": w2_pad, "b2_pad": b2_pad}


# --------------------------------------------------------------------------
# Pure-JAX reference (mirrors the PyTorch forward, incl. the b_cw bias)
# --------------------------------------------------------------------------
def reference_forward(x, p):
    V = p["w_cw"].shape[1]
    onehot = jax.nn.one_hot(x, V, dtype=jnp.float32)                 # (B,S,V)
    aw = onehot @ p["w_cw"].T + p["b_cw"][0, 0]                      # (B,S,1)
    mask = (x > 0)[..., None]
    aw = jnp.where(mask, aw, -1000000000.0)
    attn = jax.nn.softmax(aw, axis=1)
    pooled = jnp.squeeze(jnp.swapaxes(attn, 1, 2) @ onehot, axis=1)  # (B,V)
    h = jax.nn.relu(pooled @ p["w1"].T + p["b1"][0])
    logits = h @ p["w2"].T + p["b2"][0]
    return jax.nn.log_softmax(logits, axis=-1)


if __name__ == "__main__":
    B, S, VOCAB, HIDDEN = 2, 8, 32, 32
    key = jax.random.PRNGKey(0)
    k_ids, k_params = jax.random.split(key)

    # token ids in [0, VOCAB); force a couple of pad tokens (id == 0)
    x = jax.random.randint(k_ids, (B, S), 0, VOCAB, dtype=jnp.int32)
    x = x.at[0, -2:].set(0).at[1, -1:].set(0)

    params = init_params(k_params, VOCAB, HIDDEN)
    packed = pack_params(params)

    out = jax.block_until_ready(ft_ppi_onehot(x, packed))

    # (a) vs a reference using the same bf16-rounded weights: all remaining
    # kernel math is f32 (exact softmax reciprocal), so this must be tight.
    params_bf = dict(params)
    for k in ("w_cw", "w1"):
        params_bf[k] = params[k].astype(jnp.bfloat16).astype(jnp.float32)
    np.testing.assert_allclose(np.asarray(out),
                               np.asarray(reference_forward(x, params_bf)),
                               rtol=1e-4, atol=1e-4)
    # (b) vs the full-f32 PyTorch-equivalent reference: the only difference is
    # the documented bf16 quantization of w_cw / w1.
    np.testing.assert_allclose(np.asarray(out),
                               np.asarray(reference_forward(x, params)),
                               rtol=1e-2, atol=1e-2)
    print("KERNEL_OK")
</pallas_src>

<mosaic_0001>
module attributes {stable_mosaic.version = 11 : i64} {
  func.func @ft_ppi_onehot_kernel(%arg0: i32, %arg1: memref<8x8xi32, #tpu.memory_space<vmem>>, %arg2: memref<32x128xbf16, #tpu.memory_space<vmem>>, %arg3: memref<1x128xf32, #tpu.memory_space<vmem>>, %arg4: memref<128x128xf32, #tpu.memory_space<vmem>>, %arg5: memref<1x128xf32, #tpu.memory_space<vmem>>, %arg6: memref<8x128xf32, #tpu.memory_space<vmem>>) attributes {dimension_semantics = [#tpu.dimension_semantics<parallel>], iteration_bounds = array<i64: 1>, scalar_prefetch = 0 : i64, scratch_operands = 0 : i64, tpu.core_type = #tpu.core_type<tc>, window_params = [{transform_indices = @transform_0, window_bounds = array<i64: 8, 8>}, {pipeline_mode = #tpu.pipeline_mode<synchronous>, transform_indices = @transform_1, window_bounds = array<i64: 32, 128>}, {pipeline_mode = #tpu.pipeline_mode<synchronous>, transform_indices = @transform_2, window_bounds = array<i64: 1, 128>}, {pipeline_mode = #tpu.pipeline_mode<synchronous>, transform_indices = @transform_3, window_bounds = array<i64: 128, 128>}, {pipeline_mode = #tpu.pipeline_mode<synchronous>, transform_indices = @transform_4, window_bounds = array<i64: 1, 128>}, {transform_indices = @transform_5, window_bounds = array<i64: 8, 128>}]} {
    %c0 = arith.constant 0 : index
    %c0_0 = arith.constant 0 : index
    %0 = vector.load %arg1[%c0, %c0_0] : memref<8x8xi32, #tpu.memory_space<vmem>>, vector<8x8xi32>
    %1 = tpu.iota {dimensions = array<i32: 2>} : vector<8x8x32xi32>
    %2 = vector.shape_cast %0 : vector<8x8xi32> to vector<8x8x1xi32>
    %3 = vector.broadcast %2 : vector<8x8x1xi32> to vector<8x8x32xi32>
    %4 = arith.cmpi eq, %3, %1 : vector<8x8x32xi32>
    %5 = arith.extui %4 : vector<8x8x32xi1> to vector<8x8x32xi32>
    %6 = arith.sitofp %5 : vector<8x8x32xi32> to vector<8x8x32xf32>
    %7 = arith.truncf %6 : vector<8x8x32xf32> to vector<8x8x32xbf16>
    %8 = vector.shape_cast %7 : vector<8x8x32xbf16> to vector<64x32xbf16>
    %c0_1 = arith.constant 0 : index
    %c0_2 = arith.constant 0 : index
    %9 = vector.load %arg2[%c0_1, %c0_2] : memref<32x128xbf16, #tpu.memory_space<vmem>>, vector<32x128xbf16>
    %cst = arith.constant dense<0.000000e+00> : vector<64x128xf32>
    %10 = tpu.matmul %8, %9, %cst {dimension_numbers = #tpu.dot_dimension_numbers<[1], [0], [0], [1], [0, 0, 1, 1], [], []>} : vector<64x32xbf16>, vector<32x128xbf16>, vector<64x128xf32> -> vector<64x128xf32>
    %11 = vector.shape_cast %10 : vector<64x128xf32> to vector<8x8x128xf32>
    %12 = vector.extract_strided_slice %11 {offsets = [0, 0, 0], sizes = [8, 8, 1], strides = [1, 1, 1]} : vector<8x8x128xf32> to vector<8x8x1xf32>
    %13 = vector.shape_cast %0 : vector<8x8xi32> to vector<8x8x1xi32>
    %c0_i32 = arith.constant 0 : i32
    %14 = vector.broadcast %c0_i32 : i32 to vector<8x8x1xi32>
    %15 = arith.cmpi sgt, %13, %14 : vector<8x8x1xi32>
    %cst_3 = arith.constant -1.000000e+09 : f32
    %16 = vector.broadcast %cst_3 : f32 to vector<8x8x1xf32>
    %17 = arith.select %15, %12, %16 : vector<8x8x1xi1>, vector<8x8x1xf32>
    %cst_4 = arith.constant dense<0xFF800000> : vector<8x1xf32>
    %18 = vector.multi_reduction <maximumf>, %17, %cst_4 [1] : vector<8x8x1xf32> to vector<8x1xf32>
    %19 = vector.shape_cast %18 : vector<8x1xf32> to vector<8x1x1xf32>
    %20 = vector.broadcast %19 : vector<8x1x1xf32> to vector<8x8x1xf32>
    %21 = arith.subf %17, %20 : vector<8x8x1xf32>
    %22 = math.exp %21 : vector<8x8x1xf32>
    %cst_5 = arith.constant dense<0.000000e+00> : vector<8x1xf32>
    %23 = vector.multi_reduction <add>, %22, %cst_5 [1] : vector<8x8x1xf32> to vector<8x1xf32>
    %24 = vector.shape_cast %23 : vector<8x1xf32> to vector<8x1x1xf32>
    %25 = vector.broadcast %24 : vector<8x1x1xf32> to vector<8x8x1xf32>
    %26 = arith.divf %22, %25 : vector<8x8x1xf32>
    %27 = vector.broadcast %26 : vector<8x8x1xf32> to vector<8x8x128xf32>
    %28 = arith.mulf %27, %11 : vector<8x8x128xf32>
    %cst_6 = arith.constant dense<0.000000e+00> : vector<8x128xf32>
    %29 = vector.multi_reduction <add>, %28, %cst_6 [1] : vector<8x8x128xf32> to vector<8x128xf32>
    %30 = vector.shape_cast %29 : vector<8x128xf32> to vector<8x1x128xf32>
    %31 = vector.shape_cast %30 : vector<8x1x128xf32> to vector<8x128xf32>
    %c0_7 = arith.constant 0 : index
    %c0_8 = arith.constant 0 : index
    %32 = vector.load %arg3[%c0_7, %c0_8] : memref<1x128xf32, #tpu.memory_space<vmem>>, vector<1x128xf32>
    %33 = vector.broadcast %32 : vector<1x128xf32> to vector<8x128xf32>
    %34 = arith.addf %31, %33 : vector<8x128xf32>
    %cst_9 = arith.constant 0.000000e+00 : f32
    %35 = vector.broadcast %cst_9 : f32 to vector<8x128xf32>
    %36 = arith.maximumf %34, %35 : vector<8x128xf32>
    %c0_10 = arith.constant 0 : index
    %c0_11 = arith.constant 0 : index
    %37 = vector.load %arg4[%c0_10, %c0_11] : memref<128x128xf32, #tpu.memory_space<vmem>>, vector<128x128xf32>
    %cst_12 = arith.constant dense<0.000000e+00> : vector<8x128xf32>
    %38 = tpu.matmul %36, %37, %cst_12 {dimension_numbers = #tpu.dot_dimension_numbers<[1], [0], [0], [1], [0, 0, 1, 1], [], []>} : vector<8x128xf32>, vector<128x128xf32>, vector<8x128xf32> -> vector<8x128xf32>
    %c0_13 = arith.constant 0 : index
    %c0_14 = arith.constant 0 : index
    %39 = vector.load %arg5[%c0_13, %c0_14] : memref<1x128xf32, #tpu.memory_space<vmem>>, vector<1x128xf32>
    %40 = vector.broadcast %39 : vector<1x128xf32> to vector<8x128xf32>
    %41 = arith.addf %38, %40 : vector<8x128xf32>
    %cst_15 = arith.constant dense<0xFF800000> : vector<8xf32>
    %42 = vector.multi_reduction <maximumf>, %41, %cst_15 [1] : vector<8x128xf32> to vector<8xf32>
    %43 = vector.shape_cast %42 : vector<8xf32> to vector<8x1xf32>
    %44 = vector.broadcast %43 : vector<8x1xf32> to vector<8x128xf32>
    %45 = arith.subf %41, %44 : vector<8x128xf32>
    %46 = math.exp %45 : vector<8x128xf32>
    %cst_16 = arith.constant dense<0.000000e+00> : vector<8xf32>
    %47 = vector.multi_reduction <add>, %46, %cst_16 [1] : vector<8x128xf32> to vector<8xf32>
    %48 = vector.shape_cast %47 : vector<8xf32> to vector<8x1xf32>
    %49 = math.log %48 : vector<8x1xf32>
    %50 = arith.addf %43, %49 : vector<8x1xf32>
    %51 = vector.broadcast %50 : vector<8x1xf32> to vector<8x128xf32>
    %52 = arith.subf %41, %51 : vector<8x128xf32>
    %c0_17 = arith.constant 0 : index
    %c0_18 = arith.constant 0 : index
    %53 = vector.load %arg6[%c0_17, %c0_18] : memref<8x128xf32, #tpu.memory_space<vmem>>, vector<8x128xf32>
    tpu.vector_store %arg6[%c0_17, %c0_18], %52 {strides = array<i32>} : memref<8x128xf32, #tpu.memory_space<vmem>>, vector<8x128xf32>,
    return
  }
  func.func @transform_0(%arg0: i32) -> (i32, i32) {
    %c0_i32 = arith.constant 0 : i32
    %c0_i32_0 = arith.constant 0 : i32
    return %arg0, %c0_i32 : i32, i32
  }
  func.func @transform_1(%arg0: i32) -> (i32, i32) {
    %c0_i32 = arith.constant 0 : i32
    %c0_i32_0 = arith.constant 0 : i32
    %c0_i32_1 = arith.constant 0 : i32
    return %c0_i32, %c0_i32_0 : i32, i32
  }
  func.func @transform_2(%arg0: i32) -> (i32, i32) {
    %c0_i32 = arith.constant 0 : i32
    %c0_i32_0 = arith.constant 0 : i32
    %c0_i32_1 = arith.constant 0 : i32
    return %c0_i32, %c0_i32_0 : i32, i32
  }
  func.func @transform_3(%arg0: i32) -> (i32, i32) {
    %c0_i32 = arith.constant 0 : i32
    %c0_i32_0 = arith.constant 0 : i32
    %c0_i32_1 = arith.constant 0 : i32
    return %c0_i32, %c0_i32_0 : i32, i32
  }
  func.func @transform_4(%arg0: i32) -> (i32, i32) {
    %c0_i32 = arith.constant 0 : i32
    %c0_i32_0 = arith.constant 0 : i32
    %c0_i32_1 = arith.constant 0 : i32
    return %c0_i32, %c0_i32_0 : i32, i32
  }
  func.func @transform_5(%arg0: i32) -> (i32, i32) {
    %c0_i32 = arith.constant 0 : i32
    %c0_i32_0 = arith.constant 0 : i32
    return %arg0, %c0_i32 : i32, i32
  }
}

</mosaic_0001>

<llo_original>
// kernel: tpu_custom_call.1
$region0: #{tpu_custom_call.1}
  #allocation0 [shape = 'u32[]', space=smem, size = 0x4, offset = 0x4, fixed_abs, tag = 'smem constant byte address 0x4 - core index']
  #allocation1 [shape = 'u32[144,128]{1,0:T(1,128)}', space=vmem, size = 0x12000, scoped, tag = 'internal scratch']
  %s0 = inlined_call_operand.hbm [shape: s32[8,8], index: 0, kind: input, shape index: {}]
  %s1 = inlined_call_operand.hbm [shape: bf16[32,128], index: 1, kind: input, shape index: {}]
  %s2 = inlined_call_operand.vmem [shape: f32[1,128], index: 2, kind: input, shape index: {}]
  %s3 = inlined_call_operand.hbm [shape: f32[128,128], index: 3, kind: input, shape index: {}]
  %s4 = inlined_call_operand.vmem [shape: f32[1,128], index: 4, kind: input, shape index: {}]
  %s5 = inlined_call_operand.hbm [shape: f32[8,128], index: 5, kind: output, shape index: {}]
  %s6 = sld [smem:[#allocation0]]
  $region42: #{tpu_custom_call.1} parent=0
    _
  %s8 = ssub.s32 1, %s6
  %s9 = scalar_select 0, %s8, %s6
  $region1: #{tpu_custom_call.1} parent=0
    #allocation2 [shape = 'u8[4096]{0}', space=vmem, size = 0x1000, scoped, tag = 'input window, operand 0, single buffered']
    #allocation3 [shape = 's32[1]{0}', space=sflag, size = 0x4, scoped, tag = 'scoped memory for tpu_custom_call.1']
    #allocation4 [shape = 's32[1]{0}', space=sflag, size = 0x4, scoped, tag = 'scoped memory for tpu_custom_call.1']
    #allocation5 [shape = 'u8[8192]{0}', space=vmem, size = 0x2000, scoped, tag = 'input window, operand 1, single buffered']
    #allocation6 [shape = 's32[1]{0}', space=sflag, size = 0x4, scoped, tag = 'scoped memory for tpu_custom_call.1']
    #allocation7 [shape = 'u8[65536]{0}', space=vmem, size = 0x10000, scoped, tag = 'input window, operand 3, single buffered']
    #allocation8 [shape = 'u8[4096]{0}', space=vmem, size = 0x1000, scoped, tag = 'output window, operand 0, single buffered']
    %10 = vsyncpa [#allocation3], 0
    %11 = vsyncpa [#allocation6], 0
    %12 = vsyncpa [#allocation4], 0
    // Predicated region
    $region2: #{tpu_custom_call.1} parent=1 // pred_check
      _
    $region3: #{tpu_custom_call.1} parent=1 // pred_check_branch
      %14 = sbr.rel (0) target = $region5
    $region4: #{tpu_custom_call.1} parent=1 // pred_region
      %s16 = ssub.s32 128, 128
      %17 = vsyncadd [#allocation3], %s16
      %s19 = sshll.u32 [#allocation2], 4
      %s20 = int_to_ptr.vmem [resolvable:$true] %s19
      %22 = dma.hbm_to_vmem [thread:$0]  %s0, 128, %s20, [#allocation3]
    $region5: #{tpu_custom_call.1} parent=1 // pred_fallthru
      _
    // Predicated region
    $region6: #{tpu_custom_call.1} parent=1 // pred_check
      _
    $region7: #{tpu_custom_call.1} parent=1 // pred_check_branch
      %24 = sbr.rel (0) target = $region9
    $region8: #{tpu_custom_call.1} parent=1 // pred_region
      %s26 = ssub.s32 256, 256
      %27 = vsyncadd [#allocation6], %s26
      %s28 = sshll.u32 [#allocation5], 4
      %s29 = int_to_ptr.vmem [resolvable:$true] %s28
      %34 = dma.hbm_to_vmem [thread:$0]  %s1, 256, %s29, [#allocation6], 64, 64, 4
    $region9: #{tpu_custom_call.1} parent=1 // pred_fallthru
      _
    // Predicated region
    $region10: #{tpu_custom_call.1} parent=1 // pred_check
      _
    $region11: #{tpu_custom_call.1} parent=1 // pred_check_branch
      %36 = sbr.rel (0) target = $region13
    $region12: #{tpu_custom_call.1} parent=1 // pred_region
      _
    $region13: #{tpu_custom_call.1} parent=1 // pred_fallthru
      _
    // Predicated region
    $region14: #{tpu_custom_call.1} parent=1 // pred_check
      _
    $region15: #{tpu_custom_call.1} parent=1 // pred_check_branch
      %38 = sbr.rel (0) target = $region17
    $region16: #{tpu_custom_call.1} parent=1 // pred_region
      %s40 = ssub.s32 2048, 2048
      %41 = vsyncadd [#allocation6], %s40
      %s42 = sshll.u32 [#allocation7], 4
      %s43 = int_to_ptr.vmem [resolvable:$true] %s42
      %48 = dma.hbm_to_vmem [thread:$0]  %s3, 2048, %s43, [#allocation6], 128, 128, 8
    $region17: #{tpu_custom_call.1} parent=1 // pred_fallthru
      _
    // Predicated region
    $region18: #{tpu_custom_call.1} parent=1 // pred_check
      _
    $region19: #{tpu_custom_call.1} parent=1 // pred_check_branch
      %50 = sbr.rel (0) target = $region21
    $region20: #{tpu_custom_call.1} parent=1 // pred_region
      _
    $region21: #{tpu_custom_call.1} parent=1 // pred_fallthru
      _
    // Predicated region
    $region22: #{tpu_custom_call.1} parent=1 // pred_check
      _
    $region23: #{tpu_custom_call.1} parent=1 // pred_check_branch
      %52 = sbr.rel (0) target = $region25
    $region24: #{tpu_custom_call.1} parent=1 // pred_region
      %53 = dma.done [#allocation3], 128
    $region25: #{tpu_custom_call.1} parent=1 // pred_fallthru
      _
    // Predicated region
    $region26: #{tpu_custom_call.1} parent=1 // pred_check
      _
    $region27: #{tpu_custom_call.1} parent=1 // pred_check_branch
      %55 = sbr.rel (0) target = $region29
    $region28: #{tpu_custom_call.1} parent=1 // pred_region
      %56 = dma.done [#allocation6], 256
    $region29: #{tpu_custom_call.1} parent=1 // pred_fallthru
      _
    // Predicated region
    $region30: #{tpu_custom_call.1} parent=1 // pred_check
      _
    $region31: #{tpu_custom_call.1} parent=1 // pred_check_branch
      %58 = sbr.rel (0) target = $region33
    $region32: #{tpu_custom_call.1} parent=1 // pred_region
      %59 = dma.done [#allocation6], 2048
    $region33: #{tpu_custom_call.1} parent=1 // pred_fallthru
      _
    %v61 = vld [vmem:[#allocation2] sm:$0xff]
    %v62 = vlaneseq
    %v63 = vand.u32 %v62, 127
    %v64 = vlaneseq
    %v65 = vshrl.u32 %v64, 7
    %v66 = vsub.s32 0, %v65
    %v67 = vrot.slane %v61, %v66
    %69 = vbcast.lane.b32.xlu0 %v67, 256
    %v70 = vpop.permute.xlu0 %69
    %v71 = vlaneseq
    %v72 = vshrl.u32 %v71, 7
    %v73 = vsub.s32 1, %v72
    %v74 = vrot.slane %v61, %v73
    %76 = vbcast.lane.b32.xlu0 %v74, 256
    %v77 = vpop.permute.xlu0 %76
    %v78 = vlaneseq
    %v79 = vshrl.u32 %v78, 7
    %v80 = vsub.s32 2, %v79
    %v81 = vrot.slane %v61, %v80
    %83 = vbcast.lane.b32.xlu0 %v81, 256
    %v84 = vpop.permute.xlu0 %83
    %v85 = vlaneseq
    %v86 = vshrl.u32 %v85, 7
    %v87 = vsub.s32 3, %v86
    %v88 = vrot.slane %v61, %v87
    %90 = vbcast.lane.b32.xlu0 %v88, 256
    %v91 = vpop.permute.xlu0 %90
    %v92 = vlaneseq
    %v93 = vshrl.u32 %v92, 7
    %v94 = vsub.s32 4, %v93
    %v95 = vrot.slane %v61, %v94
    %97 = vbcast.lane.b32.xlu0 %v95, 256
    %v98 = vpop.permute.xlu0 %97
    %v99 = vlaneseq
    %v100 = vshrl.u32 %v99, 7
    %v101 = vsub.s32 5, %v100
    %v102 = vrot.slane %v61, %v101
    %104 = vbcast.lane.b32.xlu0 %v102, 256
    %v105 = vpop.permute.xlu0 %104
    %v106 = vlaneseq
    %v107 = vshrl.u32 %v106, 7
    %v108 = vsub.s32 6, %v107
    %v109 = vrot.slane %v61, %v108
    %111 = vbcast.lane.b32.xlu0 %v109, 256
    %v112 = vpop.permute.xlu0 %111
    %v113 = vlaneseq
    %v114 = vshrl.u32 %v113, 7
    %v115 = vsub.s32 7, %v114
    %v116 = vrot.slane %v61, %v115
    %118 = vbcast.lane.b32.xlu0 %v116, 256
    %v119 = vpop.permute.xlu0 %118
    %vm120 = vcmp.eq.s32.totalorder %v70, %v63
    %vm121 = vcmp.eq.s32.totalorder %v77, %v63
    %vm122 = vcmp.eq.s32.totalorder %v84, %v63
    %vm123 = vcmp.eq.s32.totalorder %v91, %v63
    %vm124 = vcmp.eq.s32.totalorder %v98, %v63
    %vm125 = vcmp.eq.s32.totalorder %v105, %v63
    %vm126 = vcmp.eq.s32.totalorder %v112, %v63
    %vm127 = vcmp.eq.s32.totalorder %v119, %v63
    %v128 = vsel %vm120, 1, 0
    %v129 = vsel %vm121, 1, 0
    %v130 = vsel %vm122, 1, 0
    %v131 = vsel %vm123, 1, 0
    %v132 = vsel %vm124, 1, 0
    %v133 = vsel %vm125, 1, 0
    %v134 = vsel %vm126, 1, 0
    %v135 = vsel %vm127, 1, 0
    %v136 = vcvt.s32.f32 %v128
    %v137 = vcvt.s32.f32 %v129
    %v138 = vcvt.s32.f32 %v130
    %v139 = vcvt.s32.f32 %v131
    %v140 = vcvt.s32.f32 %v132
    %v141 = vcvt.s32.f32 %v133
    %v142 = vcvt.s32.f32 %v134
    %v143 = vcvt.s32.f32 %v135
    %v144 = vpack.c.bf16 %v136, %v136
    %v145 = vpack.c.bf16 %v137, %v137
    %v146 = vpack.c.bf16 %v138, %v138
    %v147 = vpack.c.bf16 %v139, %v139
    %v148 = vpack.c.bf16 %v140, %v140
    %v149 = vpack.c.bf16 %v141, %v141
    %v150 = vpack.c.bf16 %v142, %v142
    %v151 = vpack.c.bf16 %v143, %v143
    %v152 = vld [vmem:[#allocation5] sm:$0xf]
    %v153 = vld [vmem:[#allocation5 + $0x4] sm:$0xf]
    %v154 = vld [vmem:[#allocation5 + $0x8] sm:$0xf]
    %v155 = vld [vmem:[#allocation5 + $0xc] sm:$0xf]
    %v164 = vunpack.c.l.b16 %v144
    %v165 = vunpack.c.l.b16 %v145
    %v166 = vunpack.c.l.b16 %v146
    %v167 = vunpack.c.l.b16 %v147
    %v168 = vunpack.c.l.b16 %v148
    %v169 = vunpack.c.l.b16 %v149
    %v170 = vunpack.c.l.b16 %v150
    %v171 = vunpack.c.l.b16 %v151
    %v172 = vpack.c.b16 %v165, %v164
    %v173 = vpack.c.b16 %v167, %v166
    %v174 = vpack.c.b16 %v169, %v168
    %v175 = vpack.c.b16 %v171, %v170
    %v180 = vunpack.c.l.b16 %v152
    %v181 = vunpack.c.l.b16 %v153
    %v182 = vunpack.c.l.b16 %v154
    %v183 = vunpack.c.l.b16 %v155
    %v184 = vpack.c.b16 %v181, %v180
    %v185 = vpack.c.b16 %v183, %v182
    %vm188 = vcmask 261120
    %v190 = vsel %vm188, %v172, 0
    %v193 = vsel %vm188, %v173, 0
    %v196 = vsel %vm188, %v174, 0
    %v199 = vsel %vm188, %v175, 0
    %201 = vmatprep.subr.bf16.mxu0 0
    %202 = vmatpush1.bf16.msra.mxu0 0
    %203 = vmatprep.subr.bf16.mxu0 0
    %204 = vmatpush1.bf16.msra.mxu0 0
    %205 = vmatprep.subr.bf16.mxu0 0
    %206 = vmatpush1.bf16.msra.mxu0 0
    %207 = vmatprep.subr.bf16.mxu0 0
    %208 = vmatpush1.bf16.msra.mxu0 0
    %209 = vmatprep.subr.bf16.mxu0 0
    %210 = vmatpush1.bf16.msra.mxu0 0
    %211 = vmatprep.subr.bf16.mxu0 0
    %212 = vmatpush1.bf16.msra.mxu0 0
    %213 = vmatprep.subr.bf16.mxu0 0
    %214 = vmatpush1.bf16.msra.mxu0 %v185
    %215 = vmatprep.subr.bf16.mxu0 0
    %216 = vmatpush1.bf16.msra.mxu0 %v184
    %217 = vmatprep.subr.bf16.mxu0 0
    %218 = vmatpush2.bf16.msra.mxu0 0
    %219 = vmatprep.subr.bf16.mxu0 0
    %220 = vmatpush2.bf16.msra.mxu0 0
    %221 = vmatprep.subr.bf16.mxu0 0
    %222 = vmatpush2.bf16.msra.mxu0 0
    %223 = vmatprep.subr.bf16.mxu0 0
    %224 = vmatpush2.bf16.msra.mxu0 0
    %225 = vmatprep.subr.bf16.mxu0 0
    %226 = vmatpush2.bf16.msra.mxu0 0
    %227 = vmatprep.subr.bf16.mxu0 0
    %228 = vmatpush2.bf16.msra.mxu0 0
    %229 = vmatprep.subr.bf16.mxu0 0
    %230 = vmatpush2.bf16.msra.mxu0 0
    %231 = vmatprep.subr.bf16.mxu0 0
    %232 = vmatpush2.bf16.msra.mxu0 0
    %233 = vmatprep.mubr.bf16.mxu0 0
    %234 = vmatmul.mubr.bf16.gmra.mxu0 %v190
    %v235 = vpop.f32.mrf.mxu0
    %v236 = vadd.f32 0.0, %v235
    %v237 = vpop.f32.mrf.mxu0
    %v238 = vpop.f32.mrf.mxu0
    %v239 = vadd.f32 0.0, %v238
    %v240 = vpop.f32.mrf.mxu0
    %241 = vmatprep.mubr.bf16.mxu0 0
    %242 = vmatmul.mubr.bf16.gmra.mxu0 %v193
    %v243 = vpop.f32.mrf.mxu0
    %v244 = vadd.f32 0.0, %v243
    %v245 = vpop.f32.mrf.mxu0
    %v246 = vpop.f32.mrf.mxu0
    %v247 = vadd.f32 0.0, %v246
    %v248 = vpop.f32.mrf.mxu0
    %249 = vmatprep.mubr.bf16.mxu0 0
    %250 = vmatmul.mubr.bf16.gmra.mxu0 %v196
    %v251 = vpop.f32.mrf.mxu0
    %v252 = vadd.f32 0.0, %v251
    %v253 = vpop.f32.mrf.mxu0
    %v254 = vpop.f32.mrf.mxu0
    %v255 = vadd.f32 0.0, %v254
    %v256 = vpop.f32.mrf.mxu0
    %257 = vmatprep.mubr.bf16.mxu0 0
    %258 = vmatmul.mubr.bf16.gmra.mxu0 %v199
    %v259 = vpop.f32.mrf.mxu0
    %v260 = vadd.f32 0.0, %v259
    %v261 = vpop.f32.mrf.mxu0
    %v262 = vpop.f32.mrf.mxu0
    %v263 = vadd.f32 0.0, %v262
    %v264 = vpop.f32.mrf.mxu0
    %265 = vdwg.mxu0
    %vm266 = vcmp.gt.s32.totalorder %v70, 0
    %vm267 = vcmp.gt.s32.totalorder %v77, 0
    %vm268 = vcmp.gt.s32.totalorder %v84, 0
    %vm269 = vcmp.gt.s32.totalorder %v91, 0
    %vm270 = vcmp.gt.s32.totalorder %v98, 0
    %vm271 = vcmp.gt.s32.totalorder %v105, 0
    %vm272 = vcmp.gt.s32.totalorder %v112, 0
    %vm273 = vcmp.gt.s32.totalorder %v119, 0
    %v274 = vsel %vm266, %v236, -1e+09
    %v275 = vsel %vm267, %v239, -1e+09
    %v276 = vsel %vm268, %v244, -1e+09
    %v277 = vsel %vm269, %v247, -1e+09
    %v278 = vsel %vm270, %v252, -1e+09
    %v279 = vsel %vm271, %v255, -1e+09
    %v280 = vsel %vm272, %v260, -1e+09
    %v281 = vsel %vm273, %v263, -1e+09
    %vm282 = vcmask 7168
    %v283 = vsel %vm282, %v274, -inf
    %v284 = vrot.slane %v283, 4
    %v285 = vmax.f32 %v283, %v284
    %v286 = vrot.slane %v285, 2
    %v287 = vmax.f32 %v285, %v286
    %v288 = vrot.slane %v287, 1
    %v289 = vmax.f32 %v287, %v288
    %v290 = vsel %vm282, %v275, -inf
    %v291 = vrot.slane %v290, 4
    %v292 = vmax.f32 %v290, %v291
    %v293 = vrot.slane %v292, 2
    %v294 = vmax.f32 %v292, %v293
    %v295 = vrot.slane %v294, 1
    %v296 = vmax.f32 %v294, %v295
    %v297 = vsel %vm282, %v276, -inf
    %v298 = vrot.slane %v297, 4
    %v299 = vmax.f32 %v297, %v298
    %v300 = vrot.slane %v299, 2
    %v301 = vmax.f32 %v299, %v300
    %v302 = vrot.slane %v301, 1
    %v303 = vmax.f32 %v301, %v302
    %v304 = vsel %vm282, %v277, -inf
    %v305 = vrot.slane %v304, 4
    %v306 = vmax.f32 %v304, %v305
    %v307 = vrot.slane %v306, 2
    %v308 = vmax.f32 %v306, %v307
    %v309 = vrot.slane %v308, 1
    %v310 = vmax.f32 %v308, %v309
    %v311 = vsel %vm282, %v278, -inf
    %v312 = vrot.slane %v311, 4
    %v313 = vmax.f32 %v311, %v312
    %v314 = vrot.slane %v313, 2
    %v315 = vmax.f32 %v313, %v314
    %v316 = vrot.slane %v315, 1
    %v317 = vmax.f32 %v315, %v316
    %v318 = vsel %vm282, %v279, -inf
    %v319 = vrot.slane %v318, 4
    %v320 = vmax.f32 %v318, %v319
    %v321 = vrot.slane %v320, 2
    %v322 = vmax.f32 %v320, %v321
    %v323 = vrot.slane %v322, 1
    %v324 = vmax.f32 %v322, %v323
    %v325 = vsel %vm282, %v280, -inf
    %v326 = vrot.slane %v325, 4
    %v327 = vmax.f32 %v325, %v326
    %v328 = vrot.slane %v327, 2
    %v329 = vmax.f32 %v327, %v328
    %v330 = vrot.slane %v329, 1
    %v331 = vmax.f32 %v329, %v330
    %v332 = vsel %vm282, %v281, -inf
    %v333 = vrot.slane %v332, 4
    %v334 = vmax.f32 %v332, %v333
    %v335 = vrot.slane %v334, 2
    %v336 = vmax.f32 %v334, %v335
    %v337 = vrot.slane %v336, 1
    %v338 = vmax.f32 %v336, %v337
    %v339 = vsub.f32 %v274, %v289
    %v340 = vsub.f32 %v275, %v296
    %v341 = vsub.f32 %v276, %v303
    %v342 = vsub.f32 %v277, %v310
    %v343 = vsub.f32 %v278, %v317
    %v344 = vsub.f32 %v279, %v324
    %v345 = vsub.f32 %v280, %v331
    %v346 = vsub.f32 %v281, %v338
    %v347 = vmul.f32 %v339, 1.442695
    %v348 = vpow.pop %v347
    %v349 = vmul.f32 %v340, 1.442695
    %v350 = vpow.pop %v349
    %v351 = vmul.f32 %v341, 1.442695
    %v352 = vpow.pop %v351
    %v353 = vmul.f32 %v342, 1.442695
    %v354 = vpow.pop %v353
    %v355 = vmul.f32 %v343, 1.442695
    %v356 = vpow.pop %v355
    %v357 = vmul.f32 %v344, 1.442695
    %v358 = vpow.pop %v357
    %v359 = vmul.f32 %v345, 1.442695
    %v360 = vpow.pop %v359
    %v361 = vmul.f32 %v346, 1.442695
    %v362 = vpow.pop %v361
    %v363 = vsel %vm282, %v348, 0.0
    %v364 = vrot.slane %v363, 4
    %v365 = vadd.f32 %v363, %v364
    %v366 = vrot.slane %v365, 2
    %v367 = vadd.f32 %v365, %v366
    %v368 = vrot.slane %v367, 1
    %v369 = vadd.f32 %v367, %v368
    %v370 = vsel %vm282, %v350, 0.0
    %v371 = vrot.slane %v370, 4
    %v372 = vadd.f32 %v370, %v371
    %v373 = vrot.slane %v372, 2
    %v374 = vadd.f32 %v372, %v373
    %v375 = vrot.slane %v374, 1
    %v376 = vadd.f32 %v374, %v375
    %v377 = vsel %vm282, %v352, 0.0
    %v378 = vrot.slane %v377, 4
    %v379 = vadd.f32 %v377, %v378
    %v380 = vrot.slane %v379, 2
    %v381 = vadd.f32 %v379, %v380
    %v382 = vrot.slane %v381, 1
    %v383 = vadd.f32 %v381, %v382
    %v384 = vsel %vm282, %v354, 0.0
    %v385 = vrot.slane %v384, 4
    %v386 = vadd.f32 %v384, %v385
    %v387 = vrot.slane %v386, 2
    %v388 = vadd.f32 %v386, %v387
    %v389 = vrot.slane %v388, 1
    %v390 = vadd.f32 %v388, %v389
    %v391 = vsel %vm282, %v356, 0.0
    %v392 = vrot.slane %v391, 4
    %v393 = vadd.f32 %v391, %v392
    %v394 = vrot.slane %v393, 2
    %v395 = vadd.f32 %v393, %v394
    %v396 = vrot.slane %v395, 1
    %v397 = vadd.f32 %v395, %v396
    %v398 = vsel %vm282, %v358, 0.0
    %v399 = vrot.slane %v398, 4
    %v400 = vadd.f32 %v398, %v399
    %v401 = vrot.slane %v400, 2
    %v402 = vadd.f32 %v400, %v401
    %v403 = vrot.slane %v402, 1
    %v404 = vadd.f32 %v402, %v403
    %v405 = vsel %vm282, %v360, 0.0
    %v406 = vrot.slane %v405, 4
    %v407 = vadd.f32 %v405, %v406
    %v408 = vrot.slane %v407, 2
    %v409 = vadd.f32 %v407, %v408
    %v410 = vrot.slane %v409, 1
    %v411 = vadd.f32 %v409, %v410
    %v412 = vsel %vm282, %v362, 0.0
    %v413 = vrot.slane %v412, 4
    %v414 = vadd.f32 %v412, %v413
    %v415 = vrot.slane %v414, 2
    %v416 = vadd.f32 %v414, %v415
    %v417 = vrot.slane %v416, 1
    %v418 = vadd.f32 %v416, %v417
    %v419 = vrcp.pop %v369
    %v420 = vmul.f32 %v348, %v419
    %v421 = vrcp.pop %v376
    %v422 = vmul.f32 %v350, %v421
    %v423 = vrcp.pop %v383
    %v424 = vmul.f32 %v352, %v423
    %v425 = vrcp.pop %v390
    %v426 = vmul.f32 %v354, %v425
    %v427 = vrcp.pop %v397
    %v428 = vmul.f32 %v356, %v427
    %v429 = vrcp.pop %v404
    %v430 = vmul.f32 %v358, %v429
    %v431 = vrcp.pop %v411
    %v432 = vmul.f32 %v360, %v431
    %v433 = vrcp.pop %v418
    %v434 = vmul.f32 %v362, %v433
    %436 = vset.pattern.permute.xlu0 0
    %437 = vperm.xlu0 %436, %v420
    %v438 = vpop.permute.xlu0 %437
    %441 = vset.pattern.permute.xlu0 0
    %442 = vperm.xlu0 %441, %v422
    %v443 = vpop.permute.xlu0 %442
    %446 = vset.pattern.permute.xlu0 0
    %447 = vperm.xlu0 %446, %v424
    %v448 = vpop.permute.xlu0 %447
    %451 = vset.pattern.permute.xlu0 0
    %452 = vperm.xlu0 %451, %v426
    %v453 = vpop.permute.xlu0 %452
    %456 = vset.pattern.permute.xlu0 0
    %457 = vperm.xlu0 %456, %v428
    %v458 = vpop.permute.xlu0 %457
    %461 = vset.pattern.permute.xlu0 0
    %462 = vperm.xlu0 %461, %v430
    %v463 = vpop.permute.xlu0 %462
    %466 = vset.pattern.permute.xlu0 0
    %467 = vperm.xlu0 %466, %v432
    %v468 = vpop.permute.xlu0 %467
    %471 = vset.pattern.permute.xlu0 0
    %472 = vperm.xlu0 %471, %v434
    %v473 = vpop.permute.xlu0 %472
    %v475 = vmul.f32 %v438, %v236
    %v476 = vmul.f32 %v443, %v239
    %v477 = vmul.f32 %v448, %v244
    %v478 = vmul.f32 %v453, %v247
    %v479 = vmul.f32 %v458, %v252
    %v480 = vmul.f32 %v463, %v255
    %v481 = vmul.f32 %v468, %v260
    %v482 = vmul.f32 %v473, %v263
    %v483 = vrot.slane %v475, 4
    %v484 = vadd.f32 %v475, %v483
    %v485 = vrot.slane %v484, 2
    %v486 = vadd.f32 %v484, %v485
    %v487 = vrot.slane %v486, 1
    %v488 = vadd.f32 %v486, %v487
    %v489 = vrot.slane %v476, 4
    %v490 = vadd.f32 %v476, %v489
    %v491 = vrot.slane %v490, 2
    %v492 = vadd.f32 %v490, %v491
    %v493 = vrot.slane %v492, 1
    %v494 = vadd.f32 %v492, %v493
    %v495 = vrot.slane %v477, 4
    %v496 = vadd.f32 %v477, %v495
    %v497 = vrot.slane %v496, 2
    %v498 = vadd.f32 %v496, %v497
    %v499 = vrot.slane %v498, 1
    %v500 = vadd.f32 %v498, %v499
    %v501 = vrot.slane %v478, 4
    %v502 = vadd.f32 %v478, %v501
    %v503 = vrot.slane %v502, 2
    %v504 = vadd.f32 %v502, %v503
    %v505 = vrot.slane %v504, 1
    %v506 = vadd.f32 %v504, %v505
    %v507 = vrot.slane %v479, 4
    %v508 = vadd.f32 %v479, %v507
    %v509 = vrot.slane %v508, 2
    %v510 = vadd.f32 %v508, %v509
    %v511 = vrot.slane %v510, 1
    %v512 = vadd.f32 %v510, %v511
    %v513 = vrot.slane %v480, 4
    %v514 = vadd.f32 %v480, %v513
    %v515 = vrot.slane %v514, 2
    %v516 = vadd.f32 %v514, %v515
    %v517 = vrot.slane %v516, 1
    %v518 = vadd.f32 %v516, %v517
    %v519 = vrot.slane %v481, 4
    %v520 = vadd.f32 %v481, %v519
    %v521 = vrot.slane %v520, 2
    %v522 = vadd.f32 %v520, %v521
    %v523 = vrot.slane %v522, 1
    %v524 = vadd.f32 %v522, %v523
    %v525 = vrot.slane %v482, 4
    %v526 = vadd.f32 %v482, %v525
    %v527 = vrot.slane %v526, 2
    %v528 = vadd.f32 %v526, %v527
    %v529 = vrot.slane %v528, 1
    %v530 = vadd.f32 %v528, %v529
    %v531 = vld [vmem:[%s2] sm:$0x1]
    %v533 = vlaneseq
    %v534 = vshrl.u32 %v533, 7
    %v535 = vsub.s32 0, %v534
    %v536 = vrot.slane %v531, %v535
    %v538 = vadd.f32 %v488, %v536
    %v539 = vadd.f32 %v494, %v536
    %v540 = vadd.f32 %v500, %v536
    %v541 = vadd.f32 %v506, %v536
    %v542 = vadd.f32 %v512, %v536
    %v543 = vadd.f32 %v518, %v536
    %v544 = vadd.f32 %v524, %v536
    %v545 = vadd.f32 %v530, %v536
    %v546 = vmax.f32 %v538, 0.0
    %v547 = vmax.f32 %v539, 0.0
    %v548 = vmax.f32 %v540, 0.0
    %v549 = vmax.f32 %v541, 0.0
    %v550 = vmax.f32 %v542, 0.0
    %v551 = vmax.f32 %v543, 0.0
    %v552 = vmax.f32 %v544, 0.0
    %v553 = vmax.f32 %v545, 0.0
    %v554 = vld [vmem:[#allocation7] sm:$0xff]
    %v555 = vld [vmem:[#allocation7 + $0x8] sm:$0xff]
    %v556 = vld [vmem:[#allocation7 + $0x10] sm:$0xff]
    %v557 = vld [vmem:[#allocation7 + $0x18] sm:$0xff]
    %v558 = vld [vmem:[#allocation7 + $0x20] sm:$0xff]
    %v559 = vld [vmem:[#allocation7 + $0x28] sm:$0xff]
    %v560 = vld [vmem:[#allocation7 + $0x30] sm:$0xff]
    %v561 = vld [vmem:[#allocation7 + $0x38] sm:$0xff]
    %v562 = vld [vmem:[#allocation7 + $0x40] sm:$0xff]
    %v563 = vld [vmem:[#allocation7 + $0x48] sm:$0xff]
    %v564 = vld [vmem:[#allocation7 + $0x50] sm:$0xff]
    %v565 = vld [vmem:[#allocation7 + $0x58] sm:$0xff]
    %v566 = vld [vmem:[#allocation7 + $0x60] sm:$0xff]
    %v567 = vld [vmem:[#allocation7 + $0x68] sm:$0xff]
    %v568 = vld [vmem:[#allocation7 + $0x70] sm:$0xff]
    %v569 = vld [vmem:[#allocation7 + $0x78] sm:$0xff]
    %v570 = vld [vmem:[%s4] sm:$0x1]
    %v572 = vlaneseq
    %v573 = vshrl.u32 %v572, 7
    %v574 = vsub.s32 0, %v573
    %v575 = vrot.slane %v570, %v574
    %v585 = vrot.slane %v547, 7
    %vm586 = vcmask 1041409
    %v587 = vsel %vm586, %v585, %v546
    %v588 = vrot.slane %v548, 6
    %vm589 = vcmask 1042434
    %v590 = vsel %vm589, %v588, %v587
    %v591 = vrot.slane %v549, 5
    %vm592 = vcmask 1043459
    %v593 = vsel %vm592, %v591, %v590
    %v594 = vrot.slane %v550, 4
    %vm595 = vcmask 1044484
    %v596 = vsel %vm595, %v594, %v593
    %v597 = vrot.slane %v551, 3
    %vm598 = vcmask 1045509
    %v599 = vsel %vm598, %v597, %v596
    %v600 = vrot.slane %v552, 2
    %vm601 = vcmask 1046534
    %v602 = vsel %vm601, %v600, %v599
    %v603 = vrot.slane %v553, 1
    %vm604 = vcmask 1047559
    %v605 = vsel %vm604, %v603, %v602
    %607 = vmatprep.subr.mxu0 0.0
    %608 = vmatpush1.msra.mxu0 %v569
    %609 = vmatprep.subr.mxu0 0.0
    %610 = vmatpush1.msra.mxu0 %v568
    %611 = vmatprep.subr.mxu0 0.0
    %612 = vmatpush1.msra.mxu0 %v567
    %613 = vmatprep.subr.mxu0 0.0
    %614 = vmatpush1.msra.mxu0 %v566
    %615 = vmatprep.subr.mxu0 0.0
    %616 = vmatpush1.msra.mxu0 %v565
    %617 = vmatprep.subr.mxu0 0.0
    %618 = vmatpush1.msra.mxu0 %v564
    %619 = vmatprep.subr.mxu0 0.0
    %620 = vmatpush1.msra.mxu0 %v563
    %621 = vmatprep.subr.mxu0 0.0
    %622 = vmatpush1.msra.mxu0 %v562
    %623 = vmatprep.subr.mxu0 0.0
    %624 = vmatpush1.msra.mxu0 %v561
    %625 = vmatprep.subr.mxu0 0.0
    %626 = vmatpush1.msra.mxu0 %v560
    %627 = vmatprep.subr.mxu0 0.0
    %628 = vmatpush1.msra.mxu0 %v559
    %629 = vmatprep.subr.mxu0 0.0
    %630 = vmatpush1.msra.mxu0 %v558
    %631 = vmatprep.subr.mxu0 0.0
    %632 = vmatpush1.msra.mxu0 %v557
    %633 = vmatprep.subr.mxu0 0.0
    %634 = vmatpush1.msra.mxu0 %v556
    %635 = vmatprep.subr.mxu0 0.0
    %636 = vmatpush1.msra.mxu0 %v555
    %637 = vmatprep.subr.mxu0 0.0
    %638 = vmatpush1.msra.mxu0 %v554
    %639 = vmatprep.subr.mxu0 0.0
    %640 = vmatpush2.msra.mxu0 0.0
    %641 = vmatprep.subr.mxu0 0.0
    %642 = vmatpush2.msra.mxu0 0.0
    %643 = vmatprep.subr.mxu0 0.0
    %644 = vmatpush2.msra.mxu0 0.0
    %645 = vmatprep.subr.mxu0 0.0
    %646 = vmatpush2.msra.mxu0 0.0
    %647 = vmatprep.subr.mxu0 0.0
    %648 = vmatpush2.msra.mxu0 0.0
    %649 = vmatprep.subr.mxu0 0.0
    %650 = vmatpush2.msra.mxu0 0.0
    %651 = vmatprep.subr.mxu0 0.0
    %652 = vmatpush2.msra.mxu0 0.0
    %653 = vmatprep.subr.mxu0 0.0
    %654 = vmatpush2.msra.mxu0 0.0
    %655 = vmatprep.subr.mxu0 0.0
    %656 = vmatpush2.msra.mxu0 0.0
    %657 = vmatprep.subr.mxu0 0.0
    %658 = vmatpush2.msra.mxu0 0.0
    %659 = vmatprep.subr.mxu0 0.0
    %660 = vmatpush2.msra.mxu0 0.0
    %661 = vmatprep.subr.mxu0 0.0
    %662 = vmatpush2.msra.mxu0 0.0
    %663 = vmatprep.subr.mxu0 0.0
    %664 = vmatpush2.msra.mxu0 0.0
    %665 = vmatprep.subr.mxu0 0.0
    %666 = vmatpush2.msra.mxu0 0.0
    %667 = vmatprep.subr.mxu0 0.0
    %668 = vmatpush2.msra.mxu0 0.0
    %669 = vmatprep.subr.mxu0 0.0
    %670 = vmatpush2.msra.mxu0 0.0
    %671 = vmatprep.mubr.f32.mxu0 0.0
    %672 = vmatmul.mubr.f32.gmra.mxu0 %v605
    %v673 = vpop.f32.mrf.mxu0
    %v674 = vadd.f32 %v575, %v673
    %v675 = vpop.f32.mrf.mxu0
    %676 = vdwg.mxu0
    %677 = vmax.xlane.f32.xlu0 %v674
    %v678 = vpop.xlane.xlu0 %677
    %v679 = vsub.f32 %v674, %v678
    %v680 = vmul.f32 %v679, 1.442695
    %v681 = vpow.pop %v680
    %682 = vadd.xlane.f32.xlu0 %v681
    %v683 = vpop.xlane.xlu0 %682
    %v684 = vlog2.pop %v683
    %v685 = vmul.f32 %v684, 0.6931472
    %v686 = vadd.f32 %v678, %v685
    %v687 = vsub.f32 %v674, %v686
    %688 = vst [vmem:[#allocation8] sm:$0xff] %v687
    // Predicated region
    $region34: #{tpu_custom_call.1} parent=1 // pred_check
      _
    $region35: #{tpu_custom_call.1} parent=1 // pred_check_branch
      %690 = sbr.rel (0) target = $region37
    $region36: #{tpu_custom_call.1} parent=1 // pred_region
      %s692 = ssub.s32 128, 128
      %693 = vsyncadd [#allocation4], %s692
      %s695 = sshll.u32 [#allocation8], 4
      %s696 = int_to_ptr.vmem [resolvable:$true] %s695
      %698 = dma.vmem_to_hbm [thread:$0]  %s696, 128, %s5, [#allocation4]
    $region37: #{tpu_custom_call.1} parent=1 // pred_fallthru
      _
    // Predicated region
    $region38: #{tpu_custom_call.1} parent=1 // pred_check
      _
    $region39: #{tpu_custom_call.1} parent=1 // pred_check_branch
      %700 = sbr.rel (0) target = $region41
    $region40: #{tpu_custom_call.1} parent=1 // pred_region
      %701 = dma.done [#allocation4], 128
    $region41: #{tpu_custom_call.1} parent=1 // pred_fallthru
      _
    %702 = vsyncpa [#allocation3], 1
    %703 = vsyncpa [#allocation6], 1
    %704 = vsyncpa [#allocation4], 1

</llo_original>
